<compile_context>
chip_gen: v7x
topology: tpu7x:2x2x1
jax: 0.10.0
libtpu: 0.0.40
codegen_flags: <defaults>
</compile_context>

<pallas_src>
import jax
import jax.numpy as jnp
from jax import lax
from jax.experimental import pallas as pl
from jax.experimental.pallas import tpu as pltpu

# Deterministic "parameters" of the module (set in __init__ of the torch module).
ALPHA = 1.0
BETA = 0.5
GAMMA = 0.25
EPS = 1e-9

_MiB = 1024 * 1024


def _vmem_budgets():
    """Generation-aware (physical VMEM, scoped limit, per-input tile budget)."""
    try:
        cap = int(pltpu.get_tpu_info().vmem_capacity_bytes)
    except Exception:
        cap = 64 * _MiB                      # conservative (v7x-sized) fallback
    limit = min(cap // 2, 64 * _MiB)         # 64 MiB on v5e/v6e, 32 MiB on v7x
    budget = limit // 6                      # 2 inputs x 2 buffers x tile + headroom
    return cap, limit, budget


def _choose_channel_block(C, L, itemsize, align, budget_bytes):
    """Largest channel block that divides C, is sublane-aligned and fits budget.

    Falls back to the full channel extent (exempt from the (8,128) rule) when C
    has no aligned divisor, so an illegal non-aligned partial block is never
    emitted.
    """
    if C % align != 0:
        return C                                           # full-extent block (exempt)
    fit_rows = max(align, budget_bytes // max(1, L * itemsize))
    start = min(C, (fit_rows // align) * align)
    for cand in range(start, align - 1, -align):
        if C % cand == 0:
            return cand
    return align                                           # unreachable: align | C


def _lane_pack(s, t, m):
    """Improve lane density when HW < 128 by folding channels into lanes.

    s, t: (B, C, hw); m: (B, 1, hw) float32 saliency map.
    Returns (s', t', m') where s'/t' are contiguous (free) reshapes of the big
    tensors and m'[b, 0, l] is the per-lane weight.  Never pads the big
    tensors: a non-128-multiple lane dim is simply passed as a full-extent
    block later (exempt from the (8,128) rule).
    """
    B, C, hw = s.shape
    if hw < 128 and 128 % hw == 0 and C % (128 // hw) == 0:
        p = 128 // hw
        return (s.reshape(B, C // p, hw * p),
                t.reshape(B, C // p, hw * p),
                jnp.tile(m, (1, 1, p)))
    return s, t, m


def _sqsum_partials(s, t):
    """Per-lane partial sums of (s - t)^2 reduced over the channel axis.

    s, t: (B, C, L).  Returns float32 (B, n_par, r, L); summing over axes
    (1, 2) gives the per-(batch, lane) sum of the squared difference.
    """
    B, C, L = s.shape
    itemsize = jnp.dtype(s.dtype).itemsize
    align = 8 * max(1, 4 // itemsize)        # 8 (f32), 16 (bf16), 32 (int8/fp8)

    cap, limit, budget = _vmem_budgets()
    tc = _choose_channel_block(C, L, itemsize, align, budget)
    tile_bytes = tc * L * itemsize
    # If the full-extent fallback forced a tile above budget, raise the scoped
    # limit (never beyond ~90% of physical VMEM).
    limit = max(limit, min(int(cap * 0.9), 4 * tile_bytes + 2 * _MiB))

    aligned = (tc % align == 0)
    slab = align if aligned else tc
    r = 8 if aligned else 1
    n_groups = tc // slab if aligned else 1
    fold = slab // 8 if aligned else 1

    if n_groups <= 8:
        unroll = True
    else:
        unroll = next((u for u in (8, 4, 2) if n_groups % u == 0), 1)

    n_cblk = C // tc
    # 2-way parallel split of the channel blocks keeps both v7x TensorCores
    # streaming even when B is 1 or odd (harmless on single-TC v5e/v6e).
    n_par = 2 if (n_cblk >= 2 and n_cblk % 2 == 0) else 1
    n_inner = n_cblk // n_par

    def kernel(s_ref, t_ref, acc_ref):
        # Zero the batch/core-resident accumulator on the first channel block.
        @pl.when(pl.program_id(2) == 0)
        def _():
            acc_ref[...] = jnp.zeros_like(acc_ref)

        if aligned:
            def body(g, carry):
                i = pl.multiple_of(g * slab, slab)
                d = (s_ref[0, pl.ds(i, slab), :].astype(jnp.float32)
                     - t_ref[0, pl.ds(i, slab), :].astype(jnp.float32))
                sq = d * d                                  # (slab, L)
                if fold > 1:
                    sq = sq.reshape(fold, 8, L).sum(axis=0)  # (8, L) vreg-aligned fold
                acc_ref[...] += sq[None, None]
                return carry

            lax.fori_loop(0, n_groups, body, 0, unroll=unroll)
        else:
            # Rare path: tc == C is not sublane-aligned (small / odd channel
            # count); single-shot cross-sublane reduce.
            d = s_ref[0].astype(jnp.float32) - t_ref[0].astype(jnp.float32)
            acc_ref[...] += jnp.sum(d * d, axis=0, keepdims=True)[None, None]

    return pl.pallas_call(
        kernel,
        out_shape=jax.ShapeDtypeStruct((B, n_par, r, L), jnp.float32),
        grid_spec=pltpu.PrefetchScalarGridSpec(
            num_scalar_prefetch=0,
            grid=(B, n_par, n_inner),                        # reduction axis last
            in_specs=[
                pl.BlockSpec((1, tc, L), lambda b, p, c: (b, p * n_inner + c, 0)),
                pl.BlockSpec((1, tc, L), lambda b, p, c: (b, p * n_inner + c, 0)),
            ],
            out_specs=pl.BlockSpec((1, 1, r, L), lambda b, p, c: (b, p, 0, 0)),
        ),
        compiler_params=pltpu.CompilerParams(
            dimension_semantics=("parallel", "parallel", "arbitrary"),
            vmem_limit_bytes=limit,
        ),
    )(s, t)


def _apply_map_and_sum(partials, w):
    """partials: (B, n_par, r, L) unweighted sq-diff sums; w: (B, 1, L) weight."""
    per_lane = partials.sum(axis=(1, 2))                     # (B, L), tiny
    return jnp.sum(per_lane * w[:, 0, :])


def mse_loss_with_precomputed_cam_multires(so1, to1, s_map1, so2, to2, s_map2,
                                           alpha=ALPHA, beta=BETA, gamma=GAMMA):
    """so*, to*: (B, C, H, W);  s_map*: (B, 1, H, W) matching each resolution."""
    B, C1, H1, W1 = so1.shape
    B2, C2, H2, W2 = so2.shape

    # Glue reshapes (contiguous -> free): NCHW -> (B, C, H*W), H*W on the lanes.
    so1_f = so1.reshape(B, C1, H1 * W1)
    to1_f = to1.reshape(B, C1, H1 * W1)
    m1_f = s_map1.reshape(B, 1, H1 * W1).astype(jnp.float32)
    so2_f = so2.reshape(B2, C2, H2 * W2)
    to2_f = to2.reshape(B2, C2, H2 * W2)
    m2_f = s_map2.reshape(B2, 1, H2 * W2).astype(jnp.float32)

    s1, t1, m1p = _lane_pack(so1_f, to1_f, m1_f)
    s2, t2, m2p = _lane_pack(so2_f, to2_f, m2_f)

    # One streaming reduction pass per resolution (independent tile budgets).
    p1 = _sqsum_partials(s1, t1)
    p2 = _sqsum_partials(s2, t2)

    # Weights are constant over channels -> applied once on the tiny partials:
    #   d1 + d2 = sum(sq1 * (alpha + beta*m1)),   d3 = sum(sq2 * (gamma*m2)).
    total = (_apply_map_and_sum(p1, alpha + beta * m1p)
             + _apply_map_and_sum(p2, gamma * m2p))
    return total / (alpha + beta + gamma + EPS)


if __name__ == "__main__":
    key = jax.random.PRNGKey(0)
    k = jax.random.split(key, 6)

    # Small shapes: resolution 1 = (2, 16, 16, 16), resolution 2 = (2, 32, 8, 8).
    B, C1, H1, W1 = 2, 16, 16, 16
    C2, H2, W2 = 32, 8, 8

    so1 = jax.random.normal(k[0], (B, C1, H1, W1), jnp.float32)   # student_output1
    to1 = jax.random.normal(k[1], (B, C1, H1, W1), jnp.float32)   # teacher_output1
    m1 = jax.random.uniform(k[2], (B, 1, H1, W1), jnp.float32)    # s_map1
    so2 = jax.random.normal(k[3], (B, C2, H2, W2), jnp.float32)   # student_output2
    to2 = jax.random.normal(k[4], (B, C2, H2, W2), jnp.float32)   # teacher_output2
    m2 = jax.random.uniform(k[5], (B, 1, H2, W2), jnp.float32)    # s_map2

    loss = jax.jit(mse_loss_with_precomputed_cam_multires)(so1, to1, m1, so2, to2, m2)
    jax.block_until_ready(loss)

    # Pure-JAX reference (mirrors the PyTorch forward exactly).
    d1_ref = jnp.sum((so1 - to1) ** 2) * ALPHA
    d2_ref = jnp.sum((so1 - to1) ** 2 * m1) * BETA
    d3_ref = jnp.sum((so2 - to2) ** 2 * m2) * GAMMA
    loss_ref = (d1_ref + d2_ref + d3_ref) / (ALPHA + BETA + GAMMA + EPS)

    assert jnp.allclose(loss, loss_ref, rtol=1e-4, atol=1e-4), (loss, loss_ref)
    print("KERNEL_OK")
</pallas_src>

<mosaic_0001>
module attributes {stable_mosaic.version = 11 : i64} {
  func.func @kernel(%arg0: i32, %arg1: i32, %arg2: i32, %arg3: memref<1x16x128xf32, #tpu.memory_space<vmem>>, %arg4: memref<1x16x128xf32, #tpu.memory_space<vmem>>, %arg5: memref<1x1x8x128xf32, #tpu.memory_space<vmem>>) attributes {dimension_semantics = [#tpu.dimension_semantics<parallel>, #tpu.dimension_semantics<parallel>, #tpu.dimension_semantics<arbitrary>], iteration_bounds = array<i64: 2, 1, 1>, scalar_prefetch = 0 : i64, scratch_operands = 0 : i64, tpu.core_type = #tpu.core_type<tc>, window_params = [{transform_indices = @transform_0, window_bounds = array<i64: 1, 16, 128>}, {transform_indices = @transform_1, window_bounds = array<i64: 1, 16, 128>}, {transform_indices = @transform_2, window_bounds = array<i64: 1, 1, 8, 128>}]} {
    %c0_i32 = arith.constant 0 : i32
    %0 = arith.cmpi eq, %arg2, %c0_i32 : i32
    %1 = arith.extui %0 : i1 to i32
    %c0_i32_0 = arith.constant 0 : i32
    %2 = arith.cmpi ne, %1, %c0_i32_0 : i32
    scf.if %2 {
      %cst = arith.constant 0.000000e+00 : f32
      %31 = vector.broadcast %cst : f32 to vector<1x1x8x128xf32>
      %c0_26 = arith.constant 0 : index
      %c0_27 = arith.constant 0 : index
      %c0_28 = arith.constant 0 : index
      %c0_29 = arith.constant 0 : index
      %32 = vector.load %arg5[%c0_26, %c0_27, %c0_28, %c0_29] : memref<1x1x8x128xf32, #tpu.memory_space<vmem>>, vector<1x1x8x128xf32>
      tpu.vector_store %arg5[%c0_26, %c0_27, %c0_28, %c0_29], %31 {strides = array<i32>} : memref<1x1x8x128xf32, #tpu.memory_space<vmem>>, vector<1x1x8x128xf32>,
    } else {
    }
    %c0_i32_1 = arith.constant 0 : i32
    %c8_i32 = arith.constant 8 : i32
    %3 = arith.muli %c0_i32_1, %c8_i32 : i32
    %4 = tpu.assume_multiple %3, 8 : i32
    %c0 = arith.constant 0 : index
    %5 = arith.index_cast %4 : i32 to index
    %c0_2 = arith.constant 0 : index
    %6 = vector.load %arg3[%c0, %5, %c0_2] : memref<1x16x128xf32, #tpu.memory_space<vmem>>, vector<1x8x128xf32>
    %7 = vector.shape_cast %6 : vector<1x8x128xf32> to vector<8x128xf32>
    %c0_3 = arith.constant 0 : index
    %8 = arith.index_cast %4 : i32 to index
    %c0_4 = arith.constant 0 : index
    %9 = vector.load %arg4[%c0_3, %8, %c0_4] : memref<1x16x128xf32, #tpu.memory_space<vmem>>, vector<1x8x128xf32>
    %10 = vector.shape_cast %9 : vector<1x8x128xf32> to vector<8x128xf32>
    %11 = arith.subf %7, %10 : vector<8x128xf32>
    %12 = arith.mulf %11, %11 : vector<8x128xf32>
    %c0_5 = arith.constant 0 : index
    %c0_6 = arith.constant 0 : index
    %c0_7 = arith.constant 0 : index
    %c0_8 = arith.constant 0 : index
    %13 = vector.load %arg5[%c0_5, %c0_6, %c0_7, %c0_8] : memref<1x1x8x128xf32, #tpu.memory_space<vmem>>, vector<1x1x8x128xf32>
    %14 = vector.shape_cast %12 : vector<8x128xf32> to vector<1x1x8x128xf32>
    %15 = arith.addf %13, %14 : vector<1x1x8x128xf32>
    %c0_9 = arith.constant 0 : index
    %c0_10 = arith.constant 0 : index
    %c0_11 = arith.constant 0 : index
    %c0_12 = arith.constant 0 : index
    %16 = vector.load %arg5[%c0_9, %c0_10, %c0_11, %c0_12] : memref<1x1x8x128xf32, #tpu.memory_space<vmem>>, vector<1x1x8x128xf32>
    tpu.vector_store %arg5[%c0_9, %c0_10, %c0_11, %c0_12], %15 {strides = array<i32>} : memref<1x1x8x128xf32, #tpu.memory_space<vmem>>, vector<1x1x8x128xf32>,
    %c1_i32 = arith.constant 1 : i32
    %c8_i32_13 = arith.constant 8 : i32
    %17 = arith.muli %c1_i32, %c8_i32_13 : i32
    %18 = tpu.assume_multiple %17, 8 : i32
    %c0_14 = arith.constant 0 : index
    %19 = arith.index_cast %18 : i32 to index
    %c0_15 = arith.constant 0 : index
    %20 = vector.load %arg3[%c0_14, %19, %c0_15] : memref<1x16x128xf32, #tpu.memory_space<vmem>>, vector<1x8x128xf32>
    %21 = vector.shape_cast %20 : vector<1x8x128xf32> to vector<8x128xf32>
    %c0_16 = arith.constant 0 : index
    %22 = arith.index_cast %18 : i32 to index
    %c0_17 = arith.constant 0 : index
    %23 = vector.load %arg4[%c0_16, %22, %c0_17] : memref<1x16x128xf32, #tpu.memory_space<vmem>>, vector<1x8x128xf32>
    %24 = vector.shape_cast %23 : vector<1x8x128xf32> to vector<8x128xf32>
    %25 = arith.subf %21, %24 : vector<8x128xf32>
    %26 = arith.mulf %25, %25 : vector<8x128xf32>
    %c0_18 = arith.constant 0 : index
    %c0_19 = arith.constant 0 : index
    %c0_20 = arith.constant 0 : index
    %c0_21 = arith.constant 0 : index
    %27 = vector.load %arg5[%c0_18, %c0_19, %c0_20, %c0_21] : memref<1x1x8x128xf32, #tpu.memory_space<vmem>>, vector<1x1x8x128xf32>
    %28 = vector.shape_cast %26 : vector<8x128xf32> to vector<1x1x8x128xf32>
    %29 = arith.addf %27, %28 : vector<1x1x8x128xf32>
    %c0_22 = arith.constant 0 : index
    %c0_23 = arith.constant 0 : index
    %c0_24 = arith.constant 0 : index
    %c0_25 = arith.constant 0 : index
    %30 = vector.load %arg5[%c0_22, %c0_23, %c0_24, %c0_25] : memref<1x1x8x128xf32, #tpu.memory_space<vmem>>, vector<1x1x8x128xf32>
    tpu.vector_store %arg5[%c0_22, %c0_23, %c0_24, %c0_25], %29 {strides = array<i32>} : memref<1x1x8x128xf32, #tpu.memory_space<vmem>>, vector<1x1x8x128xf32>,
    %c2_i32 = arith.constant 2 : i32
    return
  }
  func.func @transform_0(%arg0: i32, %arg1: i32, %arg2: i32) -> (i32, i32, i32) {
    %c1_i32 = arith.constant 1 : i32
    %0 = arith.muli %arg1, %c1_i32 : i32
    %1 = arith.addi %0, %arg2 : i32
    %c0_i32 = arith.constant 0 : i32
    %c0_i32_0 = arith.constant 0 : i32
    return %arg0, %1, %c0_i32 : i32, i32, i32
  }
  func.func @transform_1(%arg0: i32, %arg1: i32, %arg2: i32) -> (i32, i32, i32) {
    %c1_i32 = arith.constant 1 : i32
    %0 = arith.muli %arg1, %c1_i32 : i32
    %1 = arith.addi %0, %arg2 : i32
    %c0_i32 = arith.constant 0 : i32
    %c0_i32_0 = arith.constant 0 : i32
    return %arg0, %1, %c0_i32 : i32, i32, i32
  }
  func.func @transform_2(%arg0: i32, %arg1: i32, %arg2: i32) -> (i32, i32, i32, i32) {
    %c0_i32 = arith.constant 0 : i32
    %c0_i32_0 = arith.constant 0 : i32
    %c0_i32_1 = arith.constant 0 : i32
    return %arg0, %arg1, %c0_i32, %c0_i32_0 : i32, i32, i32, i32
  }
}

module attributes {stable_mosaic.version = 11 : i64} {
  func.func @kernel(%arg0: i32, %arg1: i32, %arg2: i32, %arg3: memref<1x16x256xf32, #tpu.memory_space<vmem>>, %arg4: memref<1x16x256xf32, #tpu.memory_space<vmem>>, %arg5: memref<1x1x8x256xf32, #tpu.memory_space<vmem>>) attributes {dimension_semantics = [#tpu.dimension_semantics<parallel>, #tpu.dimension_semantics<parallel>, #tpu.dimension_semantics<arbitrary>], iteration_bounds = array<i64: 2, 1, 1>, scalar_prefetch = 0 : i64, scratch_operands = 0 : i64, tpu.core_type = #tpu.core_type<tc>, window_params = [{transform_indices = @transform_0, window_bounds = array<i64: 1, 16, 256>}, {transform_indices = @transform_1, window_bounds = array<i64: 1, 16, 256>}, {transform_indices = @transform_2, window_bounds = array<i64: 1, 1, 8, 256>}]} {
    %c0_i32 = arith.constant 0 : i32
    %0 = arith.cmpi eq, %arg2, %c0_i32 : i32
    %1 = arith.extui %0 : i1 to i32
    %c0_i32_0 = arith.constant 0 : i32
    %2 = arith.cmpi ne, %1, %c0_i32_0 : i32
    scf.if %2 {
      %cst = arith.constant 0.000000e+00 : f32
      %31 = vector.broadcast %cst : f32 to vector<1x1x8x256xf32>
      %c0_26 = arith.constant 0 : index
      %c0_27 = arith.constant 0 : index
      %c0_28 = arith.constant 0 : index
      %c0_29 = arith.constant 0 : index
      %32 = vector.load %arg5[%c0_26, %c0_27, %c0_28, %c0_29] : memref<1x1x8x256xf32, #tpu.memory_space<vmem>>, vector<1x1x8x256xf32>
      tpu.vector_store %arg5[%c0_26, %c0_27, %c0_28, %c0_29], %31 {strides = array<i32>} : memref<1x1x8x256xf32, #tpu.memory_space<vmem>>, vector<1x1x8x256xf32>,
    } else {
    }
    %c0_i32_1 = arith.constant 0 : i32
    %c8_i32 = arith.constant 8 : i32
    %3 = arith.muli %c0_i32_1, %c8_i32 : i32
    %4 = tpu.assume_multiple %3, 8 : i32
    %c0 = arith.constant 0 : index
    %5 = arith.index_cast %4 : i32 to index
    %c0_2 = arith.constant 0 : index
    %6 = vector.load %arg3[%c0, %5, %c0_2] : memref<1x16x256xf32, #tpu.memory_space<vmem>>, vector<1x8x256xf32>
    %7 = vector.shape_cast %6 : vector<1x8x256xf32> to vector<8x256xf32>
    %c0_3 = arith.constant 0 : index
    %8 = arith.index_cast %4 : i32 to index
    %c0_4 = arith.constant 0 : index
    %9 = vector.load %arg4[%c0_3, %8, %c0_4] : memref<1x16x256xf32, #tpu.memory_space<vmem>>, vector<1x8x256xf32>
    %10 = vector.shape_cast %9 : vector<1x8x256xf32> to vector<8x256xf32>
    %11 = arith.subf %7, %10 : vector<8x256xf32>
    %12 = arith.mulf %11, %11 : vector<8x256xf32>
    %c0_5 = arith.constant 0 : index
    %c0_6 = arith.constant 0 : index
    %c0_7 = arith.constant 0 : index
    %c0_8 = arith.constant 0 : index
    %13 = vector.load %arg5[%c0_5, %c0_6, %c0_7, %c0_8] : memref<1x1x8x256xf32, #tpu.memory_space<vmem>>, vector<1x1x8x256xf32>
    %14 = vector.shape_cast %12 : vector<8x256xf32> to vector<1x1x8x256xf32>
    %15 = arith.addf %13, %14 : vector<1x1x8x256xf32>
    %c0_9 = arith.constant 0 : index
    %c0_10 = arith.constant 0 : index
    %c0_11 = arith.constant 0 : index
    %c0_12 = arith.constant 0 : index
    %16 = vector.load %arg5[%c0_9, %c0_10, %c0_11, %c0_12] : memref<1x1x8x256xf32, #tpu.memory_space<vmem>>, vector<1x1x8x256xf32>
    tpu.vector_store %arg5[%c0_9, %c0_10, %c0_11, %c0_12], %15 {strides = array<i32>} : memref<1x1x8x256xf32, #tpu.memory_space<vmem>>, vector<1x1x8x256xf32>,
    %c1_i32 = arith.constant 1 : i32
    %c8_i32_13 = arith.constant 8 : i32
    %17 = arith.muli %c1_i32, %c8_i32_13 : i32
    %18 = tpu.assume_multiple %17, 8 : i32
    %c0_14 = arith.constant 0 : index
    %19 = arith.index_cast %18 : i32 to index
    %c0_15 = arith.constant 0 : index
    %20 = vector.load %arg3[%c0_14, %19, %c0_15] : memref<1x16x256xf32, #tpu.memory_space<vmem>>, vector<1x8x256xf32>
    %21 = vector.shape_cast %20 : vector<1x8x256xf32> to vector<8x256xf32>
    %c0_16 = arith.constant 0 : index
    %22 = arith.index_cast %18 : i32 to index
    %c0_17 = arith.constant 0 : index
    %23 = vector.load %arg4[%c0_16, %22, %c0_17] : memref<1x16x256xf32, #tpu.memory_space<vmem>>, vector<1x8x256xf32>
    %24 = vector.shape_cast %23 : vector<1x8x256xf32> to vector<8x256xf32>
    %25 = arith.subf %21, %24 : vector<8x256xf32>
    %26 = arith.mulf %25, %25 : vector<8x256xf32>
    %c0_18 = arith.constant 0 : index
    %c0_19 = arith.constant 0 : index
    %c0_20 = arith.constant 0 : index
    %c0_21 = arith.constant 0 : index
    %27 = vector.load %arg5[%c0_18, %c0_19, %c0_20, %c0_21] : memref<1x1x8x256xf32, #tpu.memory_space<vmem>>, vector<1x1x8x256xf32>
    %28 = vector.shape_cast %26 : vector<8x256xf32> to vector<1x1x8x256xf32>
    %29 = arith.addf %27, %28 : vector<1x1x8x256xf32>
    %c0_22 = arith.constant 0 : index
    %c0_23 = arith.constant 0 : index
    %c0_24 = arith.constant 0 : index
    %c0_25 = arith.constant 0 : index
    %30 = vector.load %arg5[%c0_22, %c0_23, %c0_24, %c0_25] : memref<1x1x8x256xf32, #tpu.memory_space<vmem>>, vector<1x1x8x256xf32>
    tpu.vector_store %arg5[%c0_22, %c0_23, %c0_24, %c0_25], %29 {strides = array<i32>} : memref<1x1x8x256xf32, #tpu.memory_space<vmem>>, vector<1x1x8x256xf32>,
    %c2_i32 = arith.constant 2 : i32
    return
  }
  func.func @transform_0(%arg0: i32, %arg1: i32, %arg2: i32) -> (i32, i32, i32) {
    %c1_i32 = arith.constant 1 : i32
    %0 = arith.muli %arg1, %c1_i32 : i32
    %1 = arith.addi %0, %arg2 : i32
    %c0_i32 = arith.constant 0 : i32
    %c0_i32_0 = arith.constant 0 : i32
    return %arg0, %1, %c0_i32 : i32, i32, i32
  }
  func.func @transform_1(%arg0: i32, %arg1: i32, %arg2: i32) -> (i32, i32, i32) {
    %c1_i32 = arith.constant 1 : i32
    %0 = arith.muli %arg1, %c1_i32 : i32
    %1 = arith.addi %0, %arg2 : i32
    %c0_i32 = arith.constant 0 : i32
    %c0_i32_0 = arith.constant 0 : i32
    return %arg0, %1, %c0_i32 : i32, i32, i32
  }
  func.func @transform_2(%arg0: i32, %arg1: i32, %arg2: i32) -> (i32, i32, i32, i32) {
    %c0_i32 = arith.constant 0 : i32
    %c0_i32_0 = arith.constant 0 : i32
    %c0_i32_1 = arith.constant 0 : i32
    return %arg0, %arg1, %c0_i32, %c0_i32_0 : i32, i32, i32, i32
  }
}

</mosaic_0001>

<llo_original>
// kernel: mse_loss_with_precomputed_cam_multires.3
$region0: #{mse_loss_with_precomputed_cam_multires.3}
  #allocation0 [shape = 'u32[]', space=smem, size = 0x4, offset = 0x4, fixed_abs, tag = 'smem constant byte address 0x4 - core index']
  #allocation1 [shape = 'u32[144,128]{1,0:T(1,128)}', space=vmem, size = 0x12000, scoped, tag = 'internal scratch']
  %s0 = inlined_call_operand.vmem [shape: f32[2,16,128], index: 0, kind: input, shape index: {}]
  %s1 = inlined_call_operand.vmem [shape: f32[2,16,128], index: 1, kind: input, shape index: {}]
  %s2 = inlined_call_operand.vmem [shape: f32[2,1,8,128], index: 2, kind: output, shape index: {}]
  %s3 = sld [smem:[#allocation0]]
  $region45: #{mse_loss_with_precomputed_cam_multires.3} parent=0
    _
  %s5 = ssub.s32 1, %s3
  %s6 = scalar_select 0, %s5, %s3
  loop: start=0, step=1, limit=4
  $region2: #{mse_loss_with_precomputed_cam_multires.3} parent=0 // loop_pre_header
    _
  $region3: #{mse_loss_with_precomputed_cam_multires.3} parent=0 // loop_header
    %s8 = sphi 0, %s12
    %p9 = scmp.ge.s32.totalorder %s8, 4
    %s15 = sphi 0, %s34
    %s16 = sphi 0, %s30
    %s17 = sphi 0, %s26
    %s18 = sphi 0, %s15
    %s19 = sphi 0, %s16
    %s20 = sphi 0, %s17
    %s21 = sphi 0, %s18
    %s22 = sphi 0, %s19
    %s23 = sphi 0, %s20
    %s41 = sphi 0, %s43
    %s44 = sphi 0, %s41
    %s45 = sphi 0, %s44
    %s61 = sphi 0, %s45
    %s71 = sphi 0, %s73
    %s74 = sphi 0, %s71
    %s75 = sphi 0, %s74
    %s91 = sphi 0, %s75
    %s99 = sphi 0, %s101
    %s102 = sphi 0, %s99
    %s103 = sphi 0, %s102
    %s119 = sphi 0, %s103
  $region4: #{mse_loss_with_precomputed_cam_multires.3} parent=0 // loop_header_branch
    %11 = sbr.rel (%p9) target = $region8
  $region5: #{mse_loss_with_precomputed_cam_multires.3} parent=0 // loop_body
    %s13 = ssub.s32 %s8, 1
    %s14 = ssub.s32 %s8, 2
    %s24 = sadd.s32 1, %s17
    %p25 = scmp.ge.s32.totalorder %s24, 1
    %s26 = scalar_select %p25, 0, %s24
    %s27 = sadd.s32 1, %s16
    %s28 = scalar_select %p25, %s27, %s16
    %p29 = scmp.ge.s32.totalorder %s28, 1
    %s30 = scalar_select %p29, 0, %s28
    %s31 = sadd.s32 1, %s15
    %s32 = scalar_select %p29, %s31, %s15
    %p33 = scmp.ge.s32.totalorder %s32, 2
    %s34 = scalar_select %p33, 0, %s32
    %s35 = sadd.s32 %s16, %s17
    %s36 = sadd.s32 %s30, %s26
    %s37 = ssub.s32 %s15, %s34
    %s38 = ssub.s32 %s35, %s36
    %s39 = sor.u32 %s37, %s38
    %p40 = scmp.eq.s32.totalorder %s39, 0
    %s42 = sadd.s32 %s41, 1
    %s43 = scalar_select %p40, %s41, %s42
    %p46 = pneg %p40
    %p47 = scmp.eq.s32.totalorder %s8, 1
    %p48 = por %p46, %p47
    %p49 = scmp.ne.s32.totalorder %s41, %s44
    %p50 = scmp.eq.s32.totalorder %s8, 0
    %p51 = por %p49, %p50
    %p52 = scmp.ne.s32.totalorder %s41, %s44
    %p53 = scmp.eq.s32.totalorder %s13, 1
    %p54 = por %p52, %p53
    %p55 = scmp.ne.s32.totalorder %s44, %s45
    %p56 = scmp.eq.s32.totalorder %s13, 0
    %p57 = por %p55, %p56
    %p58 = scmp.ne.s32.totalorder %s44, %s45
    %p59 = scmp.eq.s32.totalorder %s14, 1
    %p60 = por %p58, %p59
    %p62 = scmp.ne.s32.totalorder %s45, %s61
    %p63 = scmp.eq.s32.totalorder %s14, 0
    %p64 = por %p62, %p63
    %s65 = sadd.s32 %s16, %s17
    %s66 = sadd.s32 %s30, %s26
    %s67 = ssub.s32 %s15, %s34
    %s68 = ssub.s32 %s65, %s66
    %s69 = sor.u32 %s67, %s68
    %p70 = scmp.eq.s32.totalorder %s69, 0
    %s72 = sadd.s32 %s71, 1
    %s73 = scalar_select %p70, %s71, %s72
    %p76 = pneg %p70
    %p77 = scmp.eq.s32.totalorder %s8, 1
    %p78 = por %p76, %p77
    %p79 = scmp.ne.s32.totalorder %s71, %s74
    %p80 = scmp.eq.s32.totalorder %s8, 0
    %p81 = por %p79, %p80
    %p82 = scmp.ne.s32.totalorder %s71, %s74
    %p83 = scmp.eq.s32.totalorder %s13, 1
    %p84 = por %p82, %p83
    %p85 = scmp.ne.s32.totalorder %s74, %s75
    %p86 = scmp.eq.s32.totalorder %s13, 0
    %p87 = por %p85, %p86
    %p88 = scmp.ne.s32.totalorder %s74, %s75
    %p89 = scmp.eq.s32.totalorder %s14, 1
    %p90 = por %p88, %p89
    %p92 = scmp.ne.s32.totalorder %s75, %s91
    %p93 = scmp.eq.s32.totalorder %s14, 0
    %p94 = por %p92, %p93
    %s95 = ssub.s32 %s15, %s34
    %s96 = ssub.s32 %s16, %s30
    %s97 = sor.u32 %s95, %s96
    %p98 = scmp.eq.s32.totalorder %s97, 0
    %s100 = sadd.s32 %s99, 1
    %s101 = scalar_select %p98, %s99, %s100
    %p104 = pneg %p98
    %p105 = scmp.eq.s32.totalorder %s8, 1
    %p106 = por %p104, %p105
    %p107 = scmp.ne.s32.totalorder %s99, %s102
    %p108 = scmp.eq.s32.totalorder %s8, 0
    %p109 = por %p107, %p108
    %p110 = scmp.ne.s32.totalorder %s99, %s102
    %p111 = scmp.eq.s32.totalorder %s13, 1
    %p112 = por %p110, %p111
    %p113 = scmp.ne.s32.totalorder %s102, %s103
    %p114 = scmp.eq.s32.totalorder %s13, 0
    %p115 = por %p113, %p114
    %p116 = scmp.ne.s32.totalorder %s102, %s103
    %p117 = scmp.eq.s32.totalorder %s14, 1
    %p118 = por %p116, %p117
    %p120 = scmp.ne.s32.totalorder %s103, %s119
    %p121 = scmp.eq.s32.totalorder %s14, 0
    %p122 = por %p120, %p121
    %p123 = scmp.le.s32.totalorder 1, %s8
    %p124 = scmp.lt.s32.totalorder %s8, 3
    %p125 = pnand %p123, %p124
    %p126 = pneg %p125
    // Predicated region
    $region9: #{mse_loss_with_precomputed_cam_multires.3} parent=5 // pred_check
      _
    $region10: #{mse_loss_with_precomputed_cam_multires.3} parent=5 // pred_check_branch
      %128 = sbr.rel (%p125) target = $region12
    $region11: #{mse_loss_with_precomputed_cam_multires.3} parent=5 // pred_region
      %s129 = ssub.s32 %s8, 1
    $region12: #{mse_loss_with_precomputed_cam_multires.3} parent=5 // pred_fallthru
      _
    %p130 = scmp.lt.s32.totalorder %s8, 2
    // Predicated region
    $region13: #{mse_loss_with_precomputed_cam_multires.3} parent=5 // pred_check
      %p131 = pneg %p130
    $region14: #{mse_loss_with_precomputed_cam_multires.3} parent=5 // pred_check_branch
      %133 = sbr.rel (%p131) target = $region16
    $region15: #{mse_loss_with_precomputed_cam_multires.3} parent=5 // pred_region
      // Predicated region
      $region17: #{mse_loss_with_precomputed_cam_multires.3} parent=15 // pred_check
        %p134 = pneg %p51
      $region18: #{mse_loss_with_precomputed_cam_multires.3} parent=15 // pred_check_branch
        %136 = sbr.rel (%p134) target = $region20
      $region19: #{mse_loss_with_precomputed_cam_multires.3} parent=15 // pred_region
        %s137 = sadd.s32 %s16, %s17
        %s138 = smul.u32 2, %s137
        %p139 = scmp.lt.s32.totalorder %s15, 1
        %s140 = scalar_select %p139, %s15, 1
        %p141 = scmp.lt.s32.totalorder %s138, 1
        %s142 = scalar_select %p141, %s138, 1
        %s143 = smul.addr %s140, 2
        %s144 = sadd.s32 %s142, %s143
        %s145 = smul.addr %s144, 8
        %s146 = scalar_lea.vmem %s0, %s145
        %s147 = sadd.s32 %s16, %s17
        %s148 = smul.u32 2, %s147
      $region20: #{mse_loss_with_precomputed_cam_multires.3} parent=15 // pred_fallthru
        _
      // Predicated region
      $region21: #{mse_loss_with_precomputed_cam_multires.3} parent=15 // pred_check
        %p149 = pneg %p81
      $region22: #{mse_loss_with_precomputed_cam_multires.3} parent=15 // pred_check_branch
        %151 = sbr.rel (%p149) target = $region24
      $region23: #{mse_loss_with_precomputed_cam_multires.3} parent=15 // pred_region
        %s152 = sadd.s32 %s16, %s17
        %s153 = smul.u32 2, %s152
        %p154 = scmp.lt.s32.totalorder %s15, 1
        %s155 = scalar_select %p154, %s15, 1
        %p156 = scmp.lt.s32.totalorder %s153, 1
        %s157 = scalar_select %p156, %s153, 1
        %s158 = smul.addr %s155, 2
        %s159 = sadd.s32 %s157, %s158
        %s160 = smul.addr %s159, 8
        %s161 = scalar_lea.vmem %s1, %s160
        %s162 = sadd.s32 %s16, %s17
        %s163 = smul.u32 2, %s162
      $region24: #{mse_loss_with_precomputed_cam_multires.3} parent=15 // pred_fallthru
        _
    $region16: #{mse_loss_with_precomputed_cam_multires.3} parent=5 // pred_fallthru
      _
    %p164 = scmp.le.s32.totalorder 1, %s8
    %p165 = scmp.lt.s32.totalorder %s8, 3
    %p166 = pnand %p164, %p165
    %p167 = pneg %p166
    // Predicated region
    $region25: #{mse_loss_with_precomputed_cam_multires.3} parent=5 // pred_check
      _
    $region26: #{mse_loss_with_precomputed_cam_multires.3} parent=5 // pred_check_branch
      %169 = sbr.rel (%p166) target = $region28
    $region27: #{mse_loss_with_precomputed_cam_multires.3} parent=5 // pred_region
      %s170 = ssub.s32 %s8, 1
      %s171 = sadd.s32 %s19, %s20
      %s172 = smul.u32 2, %s171
      %p173 = scmp.lt.s32.totalorder %s18, 1
      %s174 = scalar_select %p173, %s18, 1
      %p175 = scmp.lt.s32.totalorder %s172, 1
      %s176 = scalar_select %p175, %s172, 1
      %s177 = smul.addr %s174, 2
      %s178 = sadd.s32 %s176, %s177
      %s179 = smul.addr %s178, 8
      %s180 = scalar_lea.vmem %s0, %s179
      %p181 = pneg %p57
      %p182 = pneg %p54
      %s183 = sadd.s32 %s19, %s20
      %s184 = smul.u32 2, %s183
      %p185 = scmp.lt.s32.totalorder %s18, 1
      %s186 = scalar_select %p185, %s18, 1
      %p187 = scmp.lt.s32.totalorder %s184, 1
      %s188 = scalar_select %p187, %s184, 1
      %s189 = smul.addr %s186, 2
      %s190 = sadd.s32 %s188, %s189
      %s191 = smul.addr %s190, 8
      %s192 = scalar_lea.vmem %s1, %s191
      %p193 = pneg %p87
      %p194 = pneg %p84
      %p195 = pneg %p115
      %p196 = pneg %p112
      %p197 = scmp.lt.s32.totalorder %s18, 1
      %s198 = scalar_select %p197, %s18, 1
      %p199 = scmp.lt.s32.totalorder %s19, 0
      %s200 = scalar_select %p199, %s19, 0
      %s201 = sadd.s32 %s200, %s198
      %s202 = smul.addr %s201, 8
      %s203 = scalar_lea.vmem %s2, %s202
      %s204 = sadd.s32 %s19, %s20
      %s205 = smul.u32 2, %s204
      %p206 = scmp.lt.s32.totalorder %s18, 1
      %s207 = scalar_select %p206, %s18, 1
      %p208 = scmp.lt.s32.totalorder %s205, 1
      %s209 = scalar_select %p208, %s205, 1
      %s210 = smul.addr %s207, 2
      %s211 = sadd.s32 %s209, %s210
      %s212 = smul.addr %s211, 8
      %s213 = scalar_lea.vmem %s0, %s212
      %s214 = sadd.s32 %s19, %s20
      %s215 = smul.u32 2, %s214
      %s216 = sadd.s32 %s19, %s20
      %s217 = smul.u32 2, %s216
      %p218 = scmp.lt.s32.totalorder %s18, 1
      %s219 = scalar_select %p218, %s18, 1
      %p220 = scmp.lt.s32.totalorder %s217, 1
      %s221 = scalar_select %p220, %s217, 1
      %s222 = smul.addr %s219, 2
      %s223 = sadd.s32 %s221, %s222
      %s224 = smul.addr %s223, 8
      %s225 = scalar_lea.vmem %s1, %s224
      %s226 = sadd.s32 %s19, %s20
      %s227 = smul.u32 2, %s226
      %p228 = scmp.lt.s32.totalorder %s18, 1
      %s229 = scalar_select %p228, %s18, 1
      %p230 = scmp.lt.s32.totalorder %s19, 0
      %s231 = scalar_select %p230, %s19, 0
      %s232 = sadd.s32 %s231, %s229
      %s233 = smul.addr %s232, 8
      %s234 = scalar_lea.vmem %s2, %s233
      %p235 = scmp.eq.s32.totalorder %s20, 0
      // Predicated region
      $region29: #{mse_loss_with_precomputed_cam_multires.3} parent=27 // pred_check
        %p236 = pneg %p235
      $region30: #{mse_loss_with_precomputed_cam_multires.3} parent=27 // pred_check_branch
        %238 = sbr.rel (%p236) target = $region32
      $region31: #{mse_loss_with_precomputed_cam_multires.3} parent=27 // pred_region
        %239 = vst [vmem:[%s234] sm:$0xff] 0.0
      $region32: #{mse_loss_with_precomputed_cam_multires.3} parent=27 // pred_fallthru
        _
      %v240 = vld [vmem:[%s213] sm:$0xff]
      %v241 = vld [vmem:[%s225] sm:$0xff]
      %v242 = vsub.f32 %v240, %v241
      %v243 = vmul.f32 %v242, %v242
      %v244 = vld [vmem:[%s234] sm:$0xff]
      %v245 = vadd.f32 %v244, %v243
      %246 = vst [vmem:[%s234] sm:$0xff] %v245
      %s247 = scalar_lea.vmem %s213, 8
      %v248 = vld [vmem:[%s247] sm:$0xff]
      %s249 = scalar_lea.vmem %s225, 8
      %v250 = vld [vmem:[%s249] sm:$0xff]
      %v251 = vsub.f32 %v248, %v250
      %v252 = vmul.f32 %v251, %v251
      %v253 = vld [vmem:[%s234] sm:$0xff]
      %v254 = vadd.f32 %v253, %v252
      %255 = vst [vmem:[%s234] sm:$0xff] %v254
      %p256 = scmp.lt.s32.totalorder %s18, 1
      %s257 = scalar_select %p256, %s18, 1
      %p258 = scmp.lt.s32.totalorder %s19, 0
      %s259 = scalar_select %p258, %s19, 0
      %s260 = sadd.s32 %s259, %s257
      %s261 = smul.addr %s260, 8
      %s262 = scalar_lea.vmem %s2, %s261
      // Predicated region
      $region33: #{mse_loss_with_precomputed_cam_multires.3} parent=27 // pred_check
        %p263 = pneg %p112
      $region34: #{mse_loss_with_precomputed_cam_multires.3} parent=27 // pred_check_branch
        %265 = sbr.rel (%p263) target = $region36
      $region35: #{mse_loss_with_precomputed_cam_multires.3} parent=27 // pred_region
        _
      $region36: #{mse_loss_with_precomputed_cam_multires.3} parent=27 // pred_fallthru
        _
    $region28: #{mse_loss_with_precomputed_cam_multires.3} parent=5 // pred_fallthru
      _
    %p266 = scmp.le.s32.totalorder 2, %s8
    // Predicated region
    $region37: #{mse_loss_with_precomputed_cam_multires.3} parent=5 // pred_check
      %p267 = pneg %p266
    $region38: #{mse_loss_with_precomputed_cam_multires.3} parent=5 // pred_check_branch
      %269 = sbr.rel (%p267) target = $region40
    $region39: #{mse_loss_with_precomputed_cam_multires.3} parent=5 // pred_region
      %s270 = ssub.s32 %s8, 2
      // Predicated region
      $region41: #{mse_loss_with_precomputed_cam_multires.3} parent=39 // pred_check
        %p271 = pneg %p118
      $region42: #{mse_loss_with_precomputed_cam_multires.3} parent=39 // pred_check_branch
        %273 = sbr.rel (%p271) target = $region44
      $region43: #{mse_loss_with_precomputed_cam_multires.3} parent=39 // pred_region
        %p274 = scmp.lt.s32.totalorder %s21, 1
        %s275 = scalar_select %p274, %s21, 1
        %p276 = scmp.lt.s32.totalorder %s22, 0
        %s277 = scalar_select %p276, %s22, 0
        %s278 = sadd.s32 %s277, %s275
        %s279 = smul.addr %s278, 8
        %s280 = scalar_lea.vmem %s2, %s279
      $region44: #{mse_loss_with_precomputed_cam_multires.3} parent=39 // pred_fallthru
        _
    $region40: #{mse_loss_with_precomputed_cam_multires.3} parent=5 // pred_fallthru
      _
  $region6: #{mse_loss_with_precomputed_cam_multires.3} parent=0 // loop_footer
    %s12 = sadd.s32 1, %s8
  $region7: #{mse_loss_with_precomputed_cam_multires.3} parent=0 // loop_footer_branch
    %7 = sbr.rel target = $region3
  $region8: #{mse_loss_with_precomputed_cam_multires.3} parent=0 // loop_exit
    _

// kernel: mse_loss_with_precomputed_cam_multires.2
$region0: #{mse_loss_with_precomputed_cam_multires.2}
  #allocation0 [shape = 'u32[]', space=smem, size = 0x4, offset = 0x4, fixed_abs, tag = 'smem constant byte address 0x4 - core index']
  #allocation1 [shape = 'u32[144,128]{1,0:T(1,128)}', space=vmem, size = 0x12000, scoped, tag = 'internal scratch']
  %s0 = inlined_call_operand.vmem [shape: f32[2,16,256], index: 0, kind: input, shape index: {}]
  %s1 = inlined_call_operand.vmem [shape: f32[2,16,256], index: 1, kind: input, shape index: {}]
  %s2 = inlined_call_operand.vmem [shape: f32[2,1,8,256], index: 2, kind: output, shape index: {}]
  %s3 = sld [smem:[#allocation0]]
  $region45: #{mse_loss_with_precomputed_cam_multires.2} parent=0
    _
  %s5 = ssub.s32 1, %s3
  %s6 = scalar_select 0, %s5, %s3
  loop: start=0, step=1, limit=4
  $region2: #{mse_loss_with_precomputed_cam_multires.2} parent=0 // loop_pre_header
    _
  $region3: #{mse_loss_with_precomputed_cam_multires.2} parent=0 // loop_header
    %s8 = sphi 0, %s12
    %p9 = scmp.ge.s32.totalorder %s8, 4
    %s15 = sphi 0, %s34
    %s16 = sphi 0, %s30
    %s17 = sphi 0, %s26
    %s18 = sphi 0, %s15
    %s19 = sphi 0, %s16
    %s20 = sphi 0, %s17
    %s21 = sphi 0, %s18
    %s22 = sphi 0, %s19
    %s23 = sphi 0, %s20
    %s41 = sphi 0, %s43
    %s44 = sphi 0, %s41
    %s45 = sphi 0, %s44
    %s61 = sphi 0, %s45
    %s71 = sphi 0, %s73
    %s74 = sphi 0, %s71
    %s75 = sphi 0, %s74
    %s91 = sphi 0, %s75
    %s99 = sphi 0, %s101
    %s102 = sphi 0, %s99
    %s103 = sphi 0, %s102
    %s119 = sphi 0, %s103
  $region4: #{mse_loss_with_precomputed_cam_multires.2} parent=0 // loop_header_branch
    %11 = sbr.rel (%p9) target = $region8
  $region5: #{mse_loss_with_precomputed_cam_multires.2} parent=0 // loop_body
    %s13 = ssub.s32 %s8, 1
    %s14 = ssub.s32 %s8, 2
    %s24 = sadd.s32 1, %s17
    %p25 = scmp.ge.s32.totalorder %s24, 1
    %s26 = scalar_select %p25, 0, %s24
    %s27 = sadd.s32 1, %s16
    %s28 = scalar_select %p25, %s27, %s16
    %p29 = scmp.ge.s32.totalorder %s28, 1
    %s30 = scalar_select %p29, 0, %s28
    %s31 = sadd.s32 1, %s15
    %s32 = scalar_select %p29, %s31, %s15
    %p33 = scmp.ge.s32.totalorder %s32, 2
    %s34 = scalar_select %p33, 0, %s32
    %s35 = sadd.s32 %s16, %s17
    %s36 = sadd.s32 %s30, %s26
    %s37 = ssub.s32 %s15, %s34
    %s38 = ssub.s32 %s35, %s36
    %s39 = sor.u32 %s37, %s38
    %p40 = scmp.eq.s32.totalorder %s39, 0
    %s42 = sadd.s32 %s41, 1
    %s43 = scalar_select %p40, %s41, %s42
    %p46 = pneg %p40
    %p47 = scmp.eq.s32.totalorder %s8, 1
    %p48 = por %p46, %p47
    %p49 = scmp.ne.s32.totalorder %s41, %s44
    %p50 = scmp.eq.s32.totalorder %s8, 0
    %p51 = por %p49, %p50
    %p52 = scmp.ne.s32.totalorder %s41, %s44
    %p53 = scmp.eq.s32.totalorder %s13, 1
    %p54 = por %p52, %p53
    %p55 = scmp.ne.s32.totalorder %s44, %s45
    %p56 = scmp.eq.s32.totalorder %s13, 0
    %p57 = por %p55, %p56
    %p58 = scmp.ne.s32.totalorder %s44, %s45
    %p59 = scmp.eq.s32.totalorder %s14, 1
    %p60 = por %p58, %p59
    %p62 = scmp.ne.s32.totalorder %s45, %s61
    %p63 = scmp.eq.s32.totalorder %s14, 0
    %p64 = por %p62, %p63
    %s65 = sadd.s32 %s16, %s17
    %s66 = sadd.s32 %s30, %s26
    %s67 = ssub.s32 %s15, %s34
    %s68 = ssub.s32 %s65, %s66
    %s69 = sor.u32 %s67, %s68
    %p70 = scmp.eq.s32.totalorder %s69, 0
    %s72 = sadd.s32 %s71, 1
    %s73 = scalar_select %p70, %s71, %s72
    %p76 = pneg %p70
    %p77 = scmp.eq.s32.totalorder %s8, 1
    %p78 = por %p76, %p77
    %p79 = scmp.ne.s32.totalorder %s71, %s74
    %p80 = scmp.eq.s32.totalorder %s8, 0
    %p81 = por %p79, %p80
    %p82 = scmp.ne.s32.totalorder %s71, %s74
    %p83 = scmp.eq.s32.totalorder %s13, 1
    %p84 = por %p82, %p83
    %p85 = scmp.ne.s32.totalorder %s74, %s75
    %p86 = scmp.eq.s32.totalorder %s13, 0
    %p87 = por %p85, %p86
    %p88 = scmp.ne.s32.totalorder %s74, %s75
    %p89 = scmp.eq.s32.totalorder %s14, 1
    %p90 = por %p88, %p89
    %p92 = scmp.ne.s32.totalorder %s75, %s91
    %p93 = scmp.eq.s32.totalorder %s14, 0
    %p94 = por %p92, %p93
    %s95 = ssub.s32 %s15, %s34
    %s96 = ssub.s32 %s16, %s30
    %s97 = sor.u32 %s95, %s96
    %p98 = scmp.eq.s32.totalorder %s97, 0
    %s100 = sadd.s32 %s99, 1
    %s101 = scalar_select %p98, %s99, %s100
    %p104 = pneg %p98
    %p105 = scmp.eq.s32.totalorder %s8, 1
    %p106 = por %p104, %p105
    %p107 = scmp.ne.s32.totalorder %s99, %s102
    %p108 = scmp.eq.s32.totalorder %s8, 0
    %p109 = por %p107, %p108
    %p110 = scmp.ne.s32.totalorder %s99, %s102
    %p111 = scmp.eq.s32.totalorder %s13, 1
    %p112 = por %p110, %p111
    %p113 = scmp.ne.s32.totalorder %s102, %s103
    %p114 = scmp.eq.s32.totalorder %s13, 0
    %p115 = por %p113, %p114
    %p116 = scmp.ne.s32.totalorder %s102, %s103
    %p117 = scmp.eq.s32.totalorder %s14, 1
    %p118 = por %p116, %p117
    %p120 = scmp.ne.s32.totalorder %s103, %s119
    %p121 = scmp.eq.s32.totalorder %s14, 0
    %p122 = por %p120, %p121
    %p123 = scmp.le.s32.totalorder 1, %s8
    %p124 = scmp.lt.s32.totalorder %s8, 3
    %p125 = pnand %p123, %p124
    %p126 = pneg %p125
    // Predicated region
    $region9: #{mse_loss_with_precomputed_cam_multires.2} parent=5 // pred_check
      _
    $region10: #{mse_loss_with_precomputed_cam_multires.2} parent=5 // pred_check_branch
      %128 = sbr.rel (%p125) target = $region12
    $region11: #{mse_loss_with_precomputed_cam_multires.2} parent=5 // pred_region
      %s129 = ssub.s32 %s8, 1
    $region12: #{mse_loss_with_precomputed_cam_multires.2} parent=5 // pred_fallthru
      _
    %p130 = scmp.lt.s32.totalorder %s8, 2
    // Predicated region
    $region13: #{mse_loss_with_precomputed_cam_multires.2} parent=5 // pred_check
      %p131 = pneg %p130
    $region14: #{mse_loss_with_precomputed_cam_multires.2} parent=5 // pred_check_branch
      %133 = sbr.rel (%p131) target = $region16
    $region15: #{mse_loss_with_precomputed_cam_multires.2} parent=5 // pred_region
      // Predicated region
      $region17: #{mse_loss_with_precomputed_cam_multires.2} parent=15 // pred_check
        %p134 = pneg %p51
      $region18: #{mse_loss_with_precomputed_cam_multires.2} parent=15 // pred_check_branch
        %136 = sbr.rel (%p134) target = $region20
      $region19: #{mse_loss_with_precomputed_cam_multires.2} parent=15 // pred_region
        %s137 = sadd.s32 %s16, %s17
        %s138 = smul.u32 2, %s137
        %p139 = scmp.lt.s32.totalorder %s15, 1
        %s140 = scalar_select %p139, %s15, 1
        %p141 = scmp.lt.s32.totalorder %s138, 1
        %s142 = scalar_select %p141, %s138, 1
        %s143 = smul.addr %s142, 2
        %s144 = smul.addr %s140, 4
        %s145 = sadd.s32 %s143, %s144
        %s146 = smul.addr %s145, 8
        %s147 = scalar_lea.vmem %s0, %s146
        %s148 = sadd.s32 %s16, %s17
        %s149 = smul.u32 2, %s148
      $region20: #{mse_loss_with_precomputed_cam_multires.2} parent=15 // pred_fallthru
        _
      // Predicated region
      $region21: #{mse_loss_with_precomputed_cam_multires.2} parent=15 // pred_check
        %p150 = pneg %p81
      $region22: #{mse_loss_with_precomputed_cam_multires.2} parent=15 // pred_check_branch
        %152 = sbr.rel (%p150) target = $region24
      $region23: #{mse_loss_with_precomputed_cam_multires.2} parent=15 // pred_region
        %s153 = sadd.s32 %s16, %s17
        %s154 = smul.u32 2, %s153
        %p155 = scmp.lt.s32.totalorder %s15, 1
        %s156 = scalar_select %p155, %s15, 1
        %p157 = scmp.lt.s32.totalorder %s154, 1
        %s158 = scalar_select %p157, %s154, 1
        %s159 = smul.addr %s158, 2
        %s160 = smul.addr %s156, 4
        %s161 = sadd.s32 %s159, %s160
        %s162 = smul.addr %s161, 8
        %s163 = scalar_lea.vmem %s1, %s162
        %s164 = sadd.s32 %s16, %s17
        %s165 = smul.u32 2, %s164
      $region24: #{mse_loss_with_precomputed_cam_multires.2} parent=15 // pred_fallthru
        _
    $region16: #{mse_loss_with_precomputed_cam_multires.2} parent=5 // pred_fallthru
      _
    %p166 = scmp.le.s32.totalorder 1, %s8
    %p167 = scmp.lt.s32.totalorder %s8, 3
    %p168 = pnand %p166, %p167
    %p169 = pneg %p168
    // Predicated region
    $region25: #{mse_loss_with_precomputed_cam_multires.2} parent=5 // pred_check
      _
    $region26: #{mse_loss_with_precomputed_cam_multires.2} parent=5 // pred_check_branch
      %171 = sbr.rel (%p168) target = $region28
    $region27: #{mse_loss_with_precomputed_cam_multires.2} parent=5 // pred_region
      %s172 = ssub.s32 %s8, 1
      %s173 = sadd.s32 %s19, %s20
      %s174 = smul.u32 2, %s173
      %p175 = scmp.lt.s32.totalorder %s18, 1
      %s176 = scalar_select %p175, %s18, 1
      %p177 = scmp.lt.s32.totalorder %s174, 1
      %s178 = scalar_select %p177, %s174, 1
      %s179 = smul.addr %s178, 2
      %s180 = smul.addr %s176, 4
      %s181 = sadd.s32 %s179, %s180
      %s182 = smul.addr %s181, 8
      %s183 = scalar_lea.vmem %s0, %s182
      %p184 = pneg %p57
      %p185 = pneg %p54
      %s186 = sadd.s32 %s19, %s20
      %s187 = smul.u32 2, %s186
      %p188 = scmp.lt.s32.totalorder %s18, 1
      %s189 = scalar_select %p188, %s18, 1
      %p190 = scmp.lt.s32.totalorder %s187, 1
      %s191 = scalar_select %p190, %s187, 1
      %s192 = smul.addr %s191, 2
      %s193 = smul.addr %s189, 4
      %s194 = sadd.s32 %s192, %s193
      %s195 = smul.addr %s194, 8
      %s196 = scalar_lea.vmem %s1, %s195
      %p197 = pneg %p87
      %p198 = pneg %p84
      %p199 = pneg %p115
      %p200 = pneg %p112
      %p201 = scmp.lt.s32.totalorder %s18, 1
      %s202 = scalar_select %p201, %s18, 1
      %p203 = scmp.lt.s32.totalorder %s19, 0
      %s204 = scalar_select %p203, %s19, 0
      %s205 = smul.addr %s204, 2
      %s206 = smul.addr %s202, 2
      %s207 = sadd.s32 %s205, %s206
      %s208 = smul.addr %s207, 8
      %s209 = scalar_lea.vmem %s2, %s208
      %s210 = sadd.s32 %s19, %s20
      %s211 = smul.u32 2, %s210
      %p212 = scmp.lt.s32.totalorder %s18, 1
      %s213 = scalar_select %p212, %s18, 1
      %p214 = scmp.lt.s32.totalorder %s211, 1
      %s215 = scalar_select %p214, %s211, 1
      %s216 = smul.addr %s215, 2
      %s217 = smul.addr %s213, 4
      %s218 = sadd.s32 %s216, %s217
      %s219 = smul.addr %s218, 8
      %s220 = scalar_lea.vmem %s0, %s219
      %s221 = sadd.s32 %s19, %s20
      %s222 = smul.u32 2, %s221
      %s223 = sadd.s32 %s19, %s20
      %s224 = smul.u32 2, %s223
      %p225 = scmp.lt.s32.totalorder %s18, 1
      %s226 = scalar_select %p225, %s18, 1
      %p227 = scmp.lt.s32.totalorder %s224, 1
      %s228 = scalar_select %p227, %s224, 1
      %s229 = smul.addr %s228, 2
      %s230 = smul.addr %s226, 4
      %s231 = sadd.s32 %s229, %s230
      %s232 = smul.addr %s231, 8
      %s233 = scalar_lea.vmem %s1, %s232
      %s234 = sadd.s32 %s19, %s20
      %s235 = smul.u32 2, %s234
      %p236 = scmp.lt.s32.totalorder %s18, 1
      %s237 = scalar_select %p236, %s18, 1
      %p238 = scmp.lt.s32.totalorder %s19, 0
      %s239 = scalar_select %p238, %s19, 0
      %s240 = smul.addr %s239, 2
      %s241 = smul.addr %s237, 2
      %s242 = sadd.s32 %s240, %s241
      %s243 = smul.addr %s242, 8
      %s244 = scalar_lea.vmem %s2, %s243
      %p245 = scmp.eq.s32.totalorder %s20, 0
      // Predicated region
      $region29: #{mse_loss_with_precomputed_cam_multires.2} parent=27 // pred_check
        %p246 = pneg %p245
      $region30: #{mse_loss_with_precomputed_cam_multires.2} parent=27 // pred_check_branch
        %248 = sbr.rel (%p246) target = $region32
      $region31: #{mse_loss_with_precomputed_cam_multires.2} parent=27 // pred_region
        %249 = vst [vmem:[%s244] sm:$0xff] 0.0
        %250 = vst [vmem:[%s244 + $0x8] sm:$0xff] 0.0
      $region32: #{mse_loss_with_precomputed_cam_multires.2} parent=27 // pred_fallthru
        _
      %s251 = smul.u32 0, 2
      %s252 = smul.addr %s251, 8
      %s253 = scalar_lea.vmem %s220, %s252
      %v254 = vld [vmem:[%s253] sm:$0xff]
      %v255 = vld [vmem:[%s253 + $0x8] sm:$0xff]
      %s256 = smul.addr %s251, 8
      %s257 = scalar_lea.vmem %s233, %s256
      %v258 = vld [vmem:[%s257] sm:$0xff]
      %v259 = vld [vmem:[%s257 + $0x8] sm:$0xff]
      %v260 = vsub.f32 %v254, %v258
      %v261 = vsub.f32 %v255, %v259
      %v262 = vmul.f32 %v260, %v260
      %v263 = vmul.f32 %v261, %v261
      %v264 = vld [vmem:[%s244] sm:$0xff]
      %v265 = vld [vmem:[%s244 + $0x8] sm:$0xff]
      %v266 = vadd.f32 %v264, %v262
      %v267 = vadd.f32 %v265, %v263
      %268 = vst [vmem:[%s244] sm:$0xff] %v266
      %269 = vst [vmem:[%s244 + $0x8] sm:$0xff] %v267
      %s270 = smul.u32 1, 2
      %s271 = smul.addr %s270, 8
      %s272 = scalar_lea.vmem %s220, %s271
      %v273 = vld [vmem:[%s272] sm:$0xff]
      %v274 = vld [vmem:[%s272 + $0x8] sm:$0xff]
      %s275 = smul.addr %s270, 8
      %s276 = scalar_lea.vmem %s233, %s275
      %v277 = vld [vmem:[%s276] sm:$0xff]
      %v278 = vld [vmem:[%s276 + $0x8] sm:$0xff]
      %v279 = vsub.f32 %v273, %v277
      %v280 = vsub.f32 %v274, %v278
      %v281 = vmul.f32 %v279, %v279
      %v282 = vmul.f32 %v280, %v280
      %v283 = vld [vmem:[%s244] sm:$0xff]
      %v284 = vld [vmem:[%s244 + $0x8] sm:$0xff]
      %v285 = vadd.f32 %v283, %v281
      %v286 = vadd.f32 %v284, %v282
      %287 = vst [vmem:[%s244] sm:$0xff] %v285
      %288 = vst [vmem:[%s244 + $0x8] sm:$0xff] %v286
      %p289 = scmp.lt.s32.totalorder %s18, 1
      %s290 = scalar_select %p289, %s18, 1
      %p291 = scmp.lt.s32.totalorder %s19, 0
      %s292 = scalar_select %p291, %s19, 0
      %s293 = smul.addr %s292, 2
      %s294 = smul.addr %s290, 2
      %s295 = sadd.s32 %s293, %s294
      %s296 = smul.addr %s295, 8
      %s297 = scalar_lea.vmem %s2, %s296
      // Predicated region
      $region33: #{mse_loss_with_precomputed_cam_multires.2} parent=27 // pred_check
        %p298 = pneg %p112
      $region34: #{mse_loss_with_precomputed_cam_multires.2} parent=27 // pred_check_branch
        %300 = sbr.rel (%p298) target = $region36
      $region35: #{mse_loss_with_precomputed_cam_multires.2} parent=27 // pred_region
        _
      $region36: #{mse_loss_with_precomputed_cam_multires.2} parent=27 // pred_fallthru
        _
    $region28: #{mse_loss_with_precomputed_cam_multires.2} parent=5 // pred_fallthru
      _
    %p301 = scmp.le.s32.totalorder 2, %s8
    // Predicated region
    $region37: #{mse_loss_with_precomputed_cam_multires.2} parent=5 // pred_check
      %p302 = pneg %p301
    $region38: #{mse_loss_with_precomputed_cam_multires.2} parent=5 // pred_check_branch
      %304 = sbr.rel (%p302) target = $region40
    $region39: #{mse_loss_with_precomputed_cam_multires.2} parent=5 // pred_region
      %s305 = ssub.s32 %s8, 2
      // Predicated region
      $region41: #{mse_loss_with_precomputed_cam_multires.2} parent=39 // pred_check
        %p306 = pneg %p118
      $region42: #{mse_loss_with_precomputed_cam_multires.2} parent=39 // pred_check_branch
        %308 = sbr.rel (%p306) target = $region44
      $region43: #{mse_loss_with_precomputed_cam_multires.2} parent=39 // pred_region
        %p309 = scmp.lt.s32.totalorder %s21, 1
        %s310 = scalar_select %p309, %s21, 1
        %p311 = scmp.lt.s32.totalorder %s22, 0
        %s312 = scalar_select %p311, %s22, 0
        %s313 = smul.addr %s312, 2
        %s314 = smul.addr %s310, 2
        %s315 = sadd.s32 %s313, %s314
        %s316 = smul.addr %s315, 8
        %s317 = scalar_lea.vmem %s2, %s316
      $region44: #{mse_loss_with_precomputed_cam_multires.2} parent=39 // pred_fallthru
        _
    $region40: #{mse_loss_with_precomputed_cam_multires.2} parent=5 // pred_fallthru
      _
  $region6: #{mse_loss_with_precomputed_cam_multires.2} parent=0 // loop_footer
    %s12 = sadd.s32 1, %s8
  $region7: #{mse_loss_with_precomputed_cam_multires.2} parent=0 // loop_footer_branch
    %7 = sbr.rel target = $region3
  $region8: #{mse_loss_with_precomputed_cam_multires.2} parent=0 // loop_exit
    _

</llo_original>
